<compile_context>
chip_gen: v6e
topology: v6e:2x2x1
jax: 0.10.0
libtpu: 0.0.40
codegen_flags: <defaults>
</compile_context>

<pallas_src>
import jax
import jax.numpy as jnp
from jax.experimental import pallas as pl
from jax.experimental.pallas import tpu as pltpu


_TARGET_BLOCK_BYTES = 2 * 1024 * 1024   # ~2 MiB blocks -> ~8 MiB VMEM w/ dbl-buffering
_MIN_PIPELINE_BYTES = 512 * 1024        # above this, force multiple grid steps
_MIN_PIPELINE_BLOCKS = 4                # pipelining + both v7x TensorCores busy
_LANE_CANDIDATES = (2048, 1024, 512, 256, 128)


def _swish_kernel(x_ref, o_ref):
    # f32 internal math regardless of the I/O dtype (HBM-bound, converts are free).
    x = x_ref[...].astype(jnp.float32)
    # sigmoid(x) = 0.5 * (tanh(0.5*x) + 1): a single EUP op per element.
    sig = 0.5 * (jnp.tanh(0.5 * x) + 1.0)
    o_ref[...] = (x * sig).astype(o_ref.dtype)


def _pick_lanes(size: int) -> int:
    """Lane (last-dim) width, a multiple of 128, for the 128-aligned bulk."""
    # Prefer an exact divisor of the size (no tail) with >= 8 sublane rows.
    for lanes in _LANE_CANDIDATES:
        if size % lanes == 0 and size // lanes >= 8:
            return lanes
    for lanes in _LANE_CANDIDATES:
        if size % lanes == 0:
            return lanes
    # Not a multiple of 128: pick a width for the aligned bulk; the (< lanes)
    # element tail is handled outside the kernel.
    for lanes in _LANE_CANDIDATES:
        if size // lanes >= 8:
            return lanes
    return 128 if size >= 128 else 0


def _swish_2d(x2d: jax.Array, rows: int, lanes: int, dtype) -> jax.Array:
    elem_bytes = jnp.dtype(dtype).itemsize
    sub_mult = max(8, 32 // elem_bytes)      # 8 for f32, 16 for bf16, 32 for int8
    total_bytes = rows * lanes * elem_bytes

    # ~2 MiB blocks, but never fewer than 4 blocks once the tensor is big
    # enough to benefit from pipelining / megacore sharding.
    n_blocks = pl.cdiv(total_bytes, _TARGET_BLOCK_BYTES)
    if total_bytes > _MIN_PIPELINE_BYTES:
        n_blocks = max(n_blocks, _MIN_PIPELINE_BLOCKS)
    tile_r = pl.cdiv(rows, n_blocks)
    tile_r = ((tile_r + sub_mult - 1) // sub_mult) * sub_mult
    tile_r = min(tile_r, rows)               # full extent is always legal
    grid = (pl.cdiv(rows, tile_r),)          # ragged last block handled by Pallas

    return pl.pallas_call(
        _swish_kernel,
        out_shape=jax.ShapeDtypeStruct((rows, lanes), dtype),
        grid_spec=pltpu.PrefetchScalarGridSpec(
            num_scalar_prefetch=0,
            grid=grid,
            in_specs=[pl.BlockSpec((tile_r, lanes), lambda i: (i, 0))],
            out_specs=pl.BlockSpec((tile_r, lanes), lambda i: (i, 0)),
        ),
        compiler_params=pltpu.CompilerParams(
            dimension_semantics=("parallel",),
        ),
    )(x2d)


@jax.jit
def swish(x: jax.Array) -> jax.Array:
    """Elementwise swish: x * sigmoid(x). Accepts any shape (e.g. NCHW)."""
    orig_shape = x.shape
    dtype = x.dtype
    size = x.size
    if size == 0:
        return x

    lanes = _pick_lanes(size)
    if lanes == 0:
        # Tiny (< 128 elements): not worth a kernel launch.
        xf = x.astype(jnp.float32)
        return (xf * jax.nn.sigmoid(xf)).astype(dtype)

    x_flat = x.reshape(-1)
    bulk = (size // lanes) * lanes
    rows = bulk // lanes

    if bulk == size:
        # 128-divisible: single unpadded HBM pass through the kernel.
        out2d = _swish_2d(x_flat.reshape(rows, lanes), rows, lanes, dtype)
        return out2d.reshape(orig_shape)

    # Non-128-divisible: aligned bulk through the kernel, short tail via jnp.
    head = _swish_2d(x_flat[:bulk].reshape(rows, lanes), rows, lanes, dtype)
    head = head.reshape(-1)
    tail_f = x_flat[bulk:].astype(jnp.float32)
    tail = (tail_f * jax.nn.sigmoid(tail_f)).astype(dtype)
    return jnp.concatenate([head, tail]).reshape(orig_shape)


if __name__ == "__main__":
    key = jax.random.PRNGKey(0)

    # NCHW, matching the PyTorch convention: batch=2, channels=4, spatial=16.
    x = jax.random.normal(key, (2, 4, 16, 16), dtype=jnp.float32)
    y = swish(x)
    jax.block_until_ready(y)
    y_ref = x * jax.nn.sigmoid(x)
    assert y.shape == x.shape and y.dtype == x.dtype
    assert jnp.allclose(y, y_ref, atol=1e-5, rtol=1e-5)

    # bf16 I/O (f32 internal compute) with bf16-level tolerance.
    xb = x.astype(jnp.bfloat16)
    yb = swish(xb)
    jax.block_until_ready(yb)
    yb_ref = xb.astype(jnp.float32) * jax.nn.sigmoid(xb.astype(jnp.float32))
    assert yb.dtype == jnp.bfloat16
    assert jnp.allclose(yb.astype(jnp.float32), yb_ref, atol=2e-2, rtol=2e-2)

    # Non-128-divisible size: 128-aligned bulk through the kernel + jnp tail.
    x_mid = jax.random.normal(key, (5, 130), dtype=jnp.float32)
    y_mid = swish(x_mid)
    jax.block_until_ready(y_mid)
    assert jnp.allclose(y_mid, x_mid * jax.nn.sigmoid(x_mid), atol=1e-5, rtol=1e-5)

    # Tiny (< 128 elements) fallback path.
    x_odd = jax.random.normal(key, (3, 5, 7), dtype=jnp.float32)
    y_odd = swish(x_odd)
    jax.block_until_ready(y_odd)
    assert jnp.allclose(y_odd, x_odd * jax.nn.sigmoid(x_odd), atol=1e-5, rtol=1e-5)

    print("KERNEL_OK")
</pallas_src>

<mosaic_0001>
module attributes {stable_mosaic.version = 11 : i64} {
  func.func @_swish_kernel(%arg0: i32, %arg1: memref<8x256xf32, #tpu.memory_space<vmem>>, %arg2: memref<8x256xf32, #tpu.memory_space<vmem>>) attributes {dimension_semantics = [#tpu.dimension_semantics<parallel>], iteration_bounds = array<i64: 1>, scalar_prefetch = 0 : i64, scratch_operands = 0 : i64, tpu.core_type = #tpu.core_type<tc>, window_params = [{transform_indices = @transform_0, window_bounds = array<i64: 8, 256>}, {transform_indices = @transform_1, window_bounds = array<i64: 8, 256>}]} {
    %c0 = arith.constant 0 : index
    %c0_0 = arith.constant 0 : index
    %0 = vector.load %arg1[%c0, %c0_0] : memref<8x256xf32, #tpu.memory_space<vmem>>, vector<8x256xf32>
    %cst = arith.constant 5.000000e-01 : f32
    %1 = vector.broadcast %cst : f32 to vector<8x256xf32>
    %2 = arith.mulf %1, %0 : vector<8x256xf32>
    %3 = math.tanh %2 : vector<8x256xf32>
    %cst_1 = arith.constant 1.000000e+00 : f32
    %4 = vector.broadcast %cst_1 : f32 to vector<8x256xf32>
    %5 = arith.addf %3, %4 : vector<8x256xf32>
    %cst_2 = arith.constant 5.000000e-01 : f32
    %6 = vector.broadcast %cst_2 : f32 to vector<8x256xf32>
    %7 = arith.mulf %6, %5 : vector<8x256xf32>
    %8 = arith.mulf %0, %7 : vector<8x256xf32>
    %c0_3 = arith.constant 0 : index
    %c0_4 = arith.constant 0 : index
    %9 = vector.load %arg2[%c0_3, %c0_4] : memref<8x256xf32, #tpu.memory_space<vmem>>, vector<8x256xf32>
    tpu.vector_store %arg2[%c0_3, %c0_4], %8 {strides = array<i32>} : memref<8x256xf32, #tpu.memory_space<vmem>>, vector<8x256xf32>,
    return
  }
  func.func @transform_0(%arg0: i32) -> (i32, i32) {
    %c0_i32 = arith.constant 0 : i32
    %c0_i32_0 = arith.constant 0 : i32
    return %arg0, %c0_i32 : i32, i32
  }
  func.func @transform_1(%arg0: i32) -> (i32, i32) {
    %c0_i32 = arith.constant 0 : i32
    %c0_i32_0 = arith.constant 0 : i32
    return %arg0, %c0_i32 : i32, i32
  }
}

</mosaic_0001>

<llo_original>
// kernel: swish.1
$region0: #{swish.1}
  #allocation0 [shape = 'u32[]', space=smem, size = 0x4, offset = 0x4, fixed_abs, tag = 'smem constant byte address 0x4 - core index']
  #allocation1 [shape = 'u32[144,128]{1,0:T(1,128)}', space=vmem, size = 0x12000, scoped, tag = 'internal scratch']
  %s0 = inlined_call_operand.vmem [shape: f32[8,256], index: 0, kind: input, shape index: {}]
  %s1 = inlined_call_operand.vmem [shape: f32[8,256], index: 1, kind: output, shape index: {}]
  %s2 = sld [smem:[#allocation0]]
  $region14: #{swish.1} parent=0
    _
  %s4 = ssub.s32 1, %s2
  %s5 = scalar_select 0, %s4, %s2
  // Predicated region
  $region2: #{swish.1} parent=0 // pred_check
    _
  $region3: #{swish.1} parent=0 // pred_check_branch
    %7 = sbr.rel (0) target = $region5
  $region4: #{swish.1} parent=0 // pred_region
    _
  $region5: #{swish.1} parent=0 // pred_fallthru
    _
  %v8 = vld [vmem:[%s0] sm:$0xff]
  %v9 = vld [vmem:[%s0 + $0x8] sm:$0xff]
  %v10 = vmul.f32 %v8, 0.5
  %v11 = vmul.f32 %v9, 0.5
  %v12 = vtanh.pop %v10
  %v13 = vtanh.pop %v11
  %v14 = vadd.f32 %v12, 1.0
  %v15 = vadd.f32 %v13, 1.0
  %v16 = vmul.f32 %v14, 0.5
  %v17 = vmul.f32 %v15, 0.5
  %v18 = vmul.f32 %v8, %v16
  %v19 = vmul.f32 %v9, %v17
  %20 = vst [vmem:[%s1] sm:$0xff] %v18
  %21 = vst [vmem:[%s1 + $0x8] sm:$0xff] %v19
  // Predicated region
  $region6: #{swish.1} parent=0 // pred_check
    _
  $region7: #{swish.1} parent=0 // pred_check_branch
    %23 = sbr.rel (0) target = $region9
  $region8: #{swish.1} parent=0 // pred_region
    _
  $region9: #{swish.1} parent=0 // pred_fallthru
    _
  // Predicated region
  $region10: #{swish.1} parent=0 // pred_check
    _
  $region11: #{swish.1} parent=0 // pred_check_branch
    %25 = sbr.rel (0) target = $region13
  $region12: #{swish.1} parent=0 // pred_region
    _
  $region13: #{swish.1} parent=0 // pred_fallthru
    _

</llo_original>
